<compile_context>
chip_gen: v7x
topology: tpu7x:2x2x1
jax: 0.10.0
libtpu: 0.0.40
codegen_flags: <defaults>
</compile_context>

<pallas_src>
import functools

import jax
import jax.numpy as jnp
from jax.experimental import pallas as pl
from jax.experimental.pallas import tpu as pltpu


def _base_block_kernel(x_ref, w_ref, p_ref, o_ref, *, B, C, H, W, eps):
    """Fused: [conv3x3 + bias + FiLM + BN + ReLU] -> [conv3x3 + bias + FiLM + BN].

    x_ref: (B*C, H*W)        input, row r = (b, c_in) of flattened NCHW
    w_ref: (2, B*C, 9*B*C)   per-stage block-diagonal im2col conv matrices
    p_ref: (10, B*C, 1)      per-row vectors [g1, b1, g2, b2,
                                              conv1_b, bn1_w, bn1_b,
                                              conv2_b, bn2_w, bn2_b]
    o_ref: (B*C, H*W)        output, row r = (b, c_out)
    """
    BC, HW = B * C, H * W
    inv_n = 1.0 / float(B * H * W)

    x = x_ref[...]

    # ---- lane-index helpers + halo masks (built once, shared by both stages) --
    lane = jax.lax.broadcasted_iota(jnp.int32, (1, HW), 1)
    if (W & (W - 1)) == 0:
        w_idx = lane & (W - 1)            # W is a power of two (true here)
    else:
        w_idx = lane % W                  # general fallback

    tap_shifts = []
    tap_masks = []
    for dh in (-1, 0, 1):
        for dw in (-1, 0, 1):
            d = dh * W + dw
            conds = []
            if dh < 0:
                conds.append(lane >= (-dh) * W)        # h + dh >= 0
            if dh > 0:
                conds.append(lane < (H - dh) * W)      # h + dh <  H
            if dw < 0:
                conds.append(w_idx >= -dw)             # w + dw >= 0
            if dw > 0:
                conds.append(w_idx < W - dw)           # w + dw <  W
            valid = None
            for cnd in conds:
                valid = cnd if valid is None else (valid & cnd)
            tap_shifts.append(d)
            tap_masks.append(valid)

    # Channel-equivalence matrix for BN stats in the (B*C)-row layout:
    # A[r, r'] = 1 iff rows r and r' hold the same channel (r == r' mod C).
    r_i = jax.lax.broadcasted_iota(jnp.int32, (BC, BC), 0)
    c_i = jax.lax.broadcasted_iota(jnp.int32, (BC, BC), 1)
    diff = r_i - c_i
    chan_eq = diff == 0
    for k in range(1, B):
        chan_eq = chan_eq | (diff == k * C) | (diff == -k * C)
    A = jnp.where(chan_eq, 1.0, 0.0)

    def conv3x3(v, w_blk):
        # 9 masked lane-shifted copies (mask == implicit zero padding),
        # contracted with block-diagonal weights in ONE MXU matmul.
        taps = []
        for d, valid in zip(tap_shifts, tap_masks):
            # shifted[l] == v[l + d]   (pltpu.roll follows np.roll semantics)
            shifted = v if d == 0 else pltpu.roll(v, (-d) % HW, axis=1)
            if valid is not None:
                shifted = jnp.where(valid, shifted, 0.0)
            taps.append(shifted)
        taps_mat = jnp.concatenate(taps, axis=0)          # (9*BC, HW)
        return jnp.dot(w_blk, taps_mat, preferred_element_type=jnp.float32)

    def stage(v, w_blk, g, fb, cb, bn_w, bn_b):
        c = conv3x3(v, w_blk)                             # (BC, HW)
        # conv bias + FiLM folded into one per-row FMA: y = c*g + (cb*g + fb)
        d = cb * g + fb                                   # (BC, 1)
        y = c * g + d
        # BatchNorm (batch stats): one MXU channel-mix of [y | y*y], then lane
        # reductions -> per-channel mean / biased variance (E[x^2] - E[x]^2).
        u = jnp.concatenate([y, y * y], axis=1)           # (BC, 2*HW)
        mixed = jnp.dot(A, u, preferred_element_type=jnp.float32)
        mean = jnp.sum(mixed[:, :HW], axis=1, keepdims=True) * inv_n   # (BC, 1)
        m2 = jnp.sum(mixed[:, HW:], axis=1, keepdims=True) * inv_n     # (BC, 1)
        var = m2 - mean * mean
        scale = bn_w * jax.lax.rsqrt(var + eps)
        shift = bn_b - mean * scale
        return y * scale + shift                          # single FMA

    # Stage 1: conv1 -> +bias -> FiLM -> BN1 -> ReLU
    y = stage(x, w_ref[0], p_ref[0], p_ref[1], p_ref[4], p_ref[5], p_ref[6])
    y = jnp.maximum(y, 0.0)
    # Stage 2: conv2 -> +bias -> FiLM -> BN2
    y = stage(y, w_ref[1], p_ref[2], p_ref[3], p_ref[7], p_ref[8], p_ref[9])

    o_ref[...] = y.astype(o_ref.dtype)


def _fused_base_block(x2d, w_blk, p, *, B, C, H, W, eps=1e-5):
    """Single pallas_call running the whole BaseBlock on lane-dense tiles."""
    BC, HW = B * C, H * W
    kernel = functools.partial(_base_block_kernel, B=B, C=C, H=H, W=W, eps=eps)

    conv_flops = 2 * 2 * BC * (9 * BC) * HW
    bn_flops = 2 * 2 * BC * BC * (2 * HW)
    misc_flops = 20 * BC * HW
    bytes_accessed = 4 * (2 * BC * HW + 2 * BC * 9 * BC + 10 * BC)

    return pl.pallas_call(
        kernel,
        out_shape=jax.ShapeDtypeStruct((BC, HW), jnp.float32),
        grid=(1,),
        in_specs=[
            pl.BlockSpec((BC, HW), lambda i: (0, 0)),
            pl.BlockSpec((2, BC, 9 * BC), lambda i: (0, 0, 0)),
            pl.BlockSpec((10, BC, 1), lambda i: (0, 0, 0)),
        ],
        out_specs=pl.BlockSpec((BC, HW), lambda i: (0, 0)),
        compiler_params=pltpu.CompilerParams(
            dimension_semantics=("arbitrary",)),
        cost_estimate=pl.CostEstimate(
            flops=conv_flops + bn_flops + misc_flops,
            transcendentals=2 * BC,
            bytes_accessed=bytes_accessed),
    )(x2d, w_blk, p)


def init_params(key, num_channel, dim_in):
    ks = jax.random.split(key, 12)
    C = num_channel
    p = {
        # conv weights stored HWIO (kh, kw, cin, cout)
        "conv1_w": 0.1 * jax.random.normal(ks[0], (3, 3, C, C), jnp.float32),
        "conv1_b": 0.1 * jax.random.normal(ks[1], (C,), jnp.float32),
        "conv2_w": 0.1 * jax.random.normal(ks[2], (3, 3, C, C), jnp.float32),
        "conv2_b": 0.1 * jax.random.normal(ks[3], (C,), jnp.float32),
        # FiLM heads of the two TConvs (Linear dim_in -> C)
        "fc1_g_w": 0.1 * jax.random.normal(ks[4], (dim_in, C), jnp.float32),
        "fc1_g_b": jnp.ones((C,), jnp.float32),
        "fc1_b_w": 0.1 * jax.random.normal(ks[5], (dim_in, C), jnp.float32),
        "fc1_b_b": jnp.zeros((C,), jnp.float32),
        "fc2_g_w": 0.1 * jax.random.normal(ks[6], (dim_in, C), jnp.float32),
        "fc2_g_b": jnp.ones((C,), jnp.float32),
        "fc2_b_w": 0.1 * jax.random.normal(ks[7], (dim_in, C), jnp.float32),
        "fc2_b_b": jnp.zeros((C,), jnp.float32),
        # BatchNorm affine parameters
        "bn1_w": jnp.ones((C,), jnp.float32) + 0.1 * jax.random.normal(ks[8], (C,)),
        "bn1_b": 0.1 * jax.random.normal(ks[9], (C,), jnp.float32),
        "bn2_w": jnp.ones((C,), jnp.float32) + 0.1 * jax.random.normal(ks[10], (C,)),
        "bn2_b": 0.1 * jax.random.normal(ks[11], (C,), jnp.float32),
    }
    return p


def pack_params(params, batch_size):
    """One-time packing of tran_x-independent parameters into the lane-dense
    forms consumed by the fused kernel (done off the hot path)."""
    B = batch_size
    C = params["conv1_b"].shape[0]

    def block_diag_conv(w_hwio):
        # Block t = (kh, kw): kron(I_B, w[kh,kw].T), concatenated along columns.
        eye = jnp.eye(B, dtype=w_hwio.dtype)
        blocks = [jnp.kron(eye, w_hwio[kh, kw].T)
                  for kh in range(3) for kw in range(3)]
        return jnp.concatenate(blocks, axis=1)            # (B*C, 9*B*C)

    def rows(v):                                          # (C,) -> (B*C,)
        return jnp.tile(v, (B,))

    return {
        "w_blk": jnp.stack([block_diag_conv(params["conv1_w"]),
                            block_diag_conv(params["conv2_w"])], axis=0),
        "film_w": jnp.concatenate([params["fc1_g_w"], params["fc1_b_w"],
                                   params["fc2_g_w"], params["fc2_b_w"]], axis=1),
        "film_b": jnp.concatenate([params["fc1_g_b"], params["fc1_b_b"],
                                   params["fc2_g_b"], params["fc2_b_b"]], axis=0),
        "const_rows": jnp.stack([rows(params["conv1_b"]),
                                 rows(params["bn1_w"]), rows(params["bn1_b"]),
                                 rows(params["conv2_b"]),
                                 rows(params["bn2_w"]), rows(params["bn2_b"])],
                                axis=0),                  # (6, B*C)
    }


@jax.jit
def base_block_forward(packed, x_nchw, tran_x):
    """BaseBlock.forward(x, tran_x, mode='normal').  Input/output are NCHW."""
    B, C, H, W = x_nchw.shape
    BC = B * C

    # NCHW -> (B*C, H*W): a free, layout-preserving reshape (no transpose).
    x2d = x_nchw.reshape(BC, H * W).astype(jnp.float32)

    # All four FiLM heads in a single tiny matmul: (B, dim_in) @ (dim_in, 4C).
    gb = tran_x @ packed["film_w"] + packed["film_b"]                  # (B, 4C)
    film = gb.reshape(B, 4, C).transpose(1, 0, 2).reshape(4, BC)       # [g1,b1,g2,b2]

    # Per-row parameter pack consumed by the kernel: (10, B*C, 1).
    p = jnp.concatenate([film, packed["const_rows"]], axis=0)[:, :, None]

    out2d = _fused_base_block(x2d, packed["w_blk"], p, B=B, C=C, H=H, W=W)
    return out2d.reshape(B, C, H, W)


def _reference_forward(params, x_nchw, tran_x, eps=1e-5):
    """Pure-JAX reference of the assumed BaseBlock semantics (for validation)."""
    hi = jax.lax.Precision.HIGHEST

    def film(wg, bg, wb, bb):
        g = jnp.dot(tran_x, wg, precision=hi) + bg
        b = jnp.dot(tran_x, wb, precision=hi) + bb
        return g[:, :, None, None], b[:, :, None, None]

    def conv(v, w_hwio, bias):
        out = jax.lax.conv_general_dilated(
            v, w_hwio, window_strides=(1, 1), padding="SAME",
            dimension_numbers=("NCHW", "HWIO", "NCHW"), precision=hi)
        return out + bias[None, :, None, None]

    def bn(v, w, b):
        mean = v.mean(axis=(0, 2, 3), keepdims=True)
        var = v.var(axis=(0, 2, 3), keepdims=True)        # biased variance
        return ((v - mean) * jax.lax.rsqrt(var + eps)
                * w[None, :, None, None] + b[None, :, None, None])

    g1, b1 = film(params["fc1_g_w"], params["fc1_g_b"],
                  params["fc1_b_w"], params["fc1_b_b"])
    y = conv(x_nchw, params["conv1_w"], params["conv1_b"])
    y = y * g1 + b1
    y = bn(y, params["bn1_w"], params["bn1_b"])
    y = jnp.maximum(y, 0.0)

    g2, b2 = film(params["fc2_g_w"], params["fc2_g_b"],
                  params["fc2_b_w"], params["fc2_b_b"])
    y = conv(y, params["conv2_w"], params["conv2_b"])
    y = y * g2 + b2
    y = bn(y, params["bn2_w"], params["bn2_b"])
    return y


if __name__ == "__main__":
    B, C, H, W = 2, 4, 16, 16       # num_channel = 4
    dim_in = 8                      # dimension of tran_x

    key = jax.random.PRNGKey(0)
    k_x, k_t, k_p = jax.random.split(key, 3)
    x = jax.random.normal(k_x, (B, C, H, W), jnp.float32)
    tran_x = jax.random.normal(k_t, (B, dim_in), jnp.float32)
    params = init_params(k_p, C, dim_in)
    packed = pack_params(params, B)   # one-time packing, off the hot path

    out = base_block_forward(packed, x, tran_x)
    jax.block_until_ready(out)
    assert out.shape == (B, C, H, W)

    ref = _reference_forward(params, x, tran_x)
    err = float(jnp.max(jnp.abs(out - ref)))
    assert err < 5e-2, f"kernel/reference mismatch: max abs err = {err}"

    print("KERNEL_OK")
</pallas_src>

<mosaic_0001>
module attributes {stable_mosaic.version = 11 : i64} {
  func.func @_base_block_kernel(%arg0: i32, %arg1: memref<8x256xf32, #tpu.memory_space<vmem>>, %arg2: memref<2x8x72xf32, #tpu.memory_space<vmem>>, %arg3: memref<10x8x1xf32, #tpu.memory_space<vmem>>, %arg4: memref<8x256xf32, #tpu.memory_space<vmem>>) attributes {dimension_semantics = [#tpu.dimension_semantics<arbitrary>], iteration_bounds = array<i64: 1>, scalar_prefetch = 0 : i64, scratch_operands = 0 : i64, tpu.core_type = #tpu.core_type<tc>, window_params = [{pipeline_mode = #tpu.pipeline_mode<synchronous>, transform_indices = @transform_0, window_bounds = array<i64: 8, 256>}, {pipeline_mode = #tpu.pipeline_mode<synchronous>, transform_indices = @transform_1, window_bounds = array<i64: 2, 8, 72>}, {pipeline_mode = #tpu.pipeline_mode<synchronous>, transform_indices = @transform_2, window_bounds = array<i64: 10, 8, 1>}, {pipeline_mode = #tpu.pipeline_mode<synchronous>, transform_indices = @transform_3, window_bounds = array<i64: 8, 256>}]} {
    %c0 = arith.constant 0 : index
    %c0_0 = arith.constant 0 : index
    %0 = vector.load %arg1[%c0, %c0_0] : memref<8x256xf32, #tpu.memory_space<vmem>>, vector<8x256xf32>
    %1 = tpu.iota {dimensions = array<i32: 1>} : vector<1x256xi32>
    %c15_i32 = arith.constant 15 : i32
    %2 = vector.broadcast %c15_i32 : i32 to vector<1x256xi32>
    %3 = arith.andi %1, %2 : vector<1x256xi32>
    %c16_i32 = arith.constant 16 : i32
    %4 = vector.broadcast %c16_i32 : i32 to vector<1x256xi32>
    %5 = arith.cmpi sge, %1, %4 : vector<1x256xi32>
    %c1_i32 = arith.constant 1 : i32
    %6 = vector.broadcast %c1_i32 : i32 to vector<1x256xi32>
    %7 = arith.cmpi sge, %3, %6 : vector<1x256xi32>
    %8 = arith.andi %5, %7 : vector<1x256xi1>
    %c16_i32_1 = arith.constant 16 : i32
    %9 = vector.broadcast %c16_i32_1 : i32 to vector<1x256xi32>
    %10 = arith.cmpi sge, %1, %9 : vector<1x256xi32>
    %c16_i32_2 = arith.constant 16 : i32
    %11 = vector.broadcast %c16_i32_2 : i32 to vector<1x256xi32>
    %12 = arith.cmpi sge, %1, %11 : vector<1x256xi32>
    %c15_i32_3 = arith.constant 15 : i32
    %13 = vector.broadcast %c15_i32_3 : i32 to vector<1x256xi32>
    %14 = arith.cmpi slt, %3, %13 : vector<1x256xi32>
    %15 = arith.andi %12, %14 : vector<1x256xi1>
    %c1_i32_4 = arith.constant 1 : i32
    %16 = vector.broadcast %c1_i32_4 : i32 to vector<1x256xi32>
    %17 = arith.cmpi sge, %3, %16 : vector<1x256xi32>
    %c15_i32_5 = arith.constant 15 : i32
    %18 = vector.broadcast %c15_i32_5 : i32 to vector<1x256xi32>
    %19 = arith.cmpi slt, %3, %18 : vector<1x256xi32>
    %c240_i32 = arith.constant 240 : i32
    %20 = vector.broadcast %c240_i32 : i32 to vector<1x256xi32>
    %21 = arith.cmpi slt, %1, %20 : vector<1x256xi32>
    %c1_i32_6 = arith.constant 1 : i32
    %22 = vector.broadcast %c1_i32_6 : i32 to vector<1x256xi32>
    %23 = arith.cmpi sge, %3, %22 : vector<1x256xi32>
    %24 = arith.andi %21, %23 : vector<1x256xi1>
    %c240_i32_7 = arith.constant 240 : i32
    %25 = vector.broadcast %c240_i32_7 : i32 to vector<1x256xi32>
    %26 = arith.cmpi slt, %1, %25 : vector<1x256xi32>
    %c240_i32_8 = arith.constant 240 : i32
    %27 = vector.broadcast %c240_i32_8 : i32 to vector<1x256xi32>
    %28 = arith.cmpi slt, %1, %27 : vector<1x256xi32>
    %c15_i32_9 = arith.constant 15 : i32
    %29 = vector.broadcast %c15_i32_9 : i32 to vector<1x256xi32>
    %30 = arith.cmpi slt, %3, %29 : vector<1x256xi32>
    %31 = arith.andi %28, %30 : vector<1x256xi1>
    %32 = tpu.iota {dimensions = array<i32: 0>} : vector<8x8xi32>
    %33 = tpu.iota {dimensions = array<i32: 1>} : vector<8x8xi32>
    %34 = arith.subi %32, %33 : vector<8x8xi32>
    %c0_i32 = arith.constant 0 : i32
    %35 = vector.broadcast %c0_i32 : i32 to vector<8x8xi32>
    %36 = arith.cmpi eq, %34, %35 : vector<8x8xi32>
    %c4_i32 = arith.constant 4 : i32
    %37 = vector.broadcast %c4_i32 : i32 to vector<8x8xi32>
    %38 = arith.cmpi eq, %34, %37 : vector<8x8xi32>
    %39 = arith.ori %36, %38 : vector<8x8xi1>
    %c-4_i32 = arith.constant -4 : i32
    %40 = vector.broadcast %c-4_i32 : i32 to vector<8x8xi32>
    %41 = arith.cmpi eq, %34, %40 : vector<8x8xi32>
    %42 = arith.ori %39, %41 : vector<8x8xi1>
    %cst = arith.constant 1.000000e+00 : f32
    %cst_10 = arith.constant 0.000000e+00 : f32
    %43 = vector.broadcast %cst : f32 to vector<8x8xf32>
    %44 = vector.broadcast %cst_10 : f32 to vector<8x8xf32>
    %45 = arith.select %42, %43, %44 : vector<8x8xi1>, vector<8x8xf32>
    %c0_11 = arith.constant 0 : index
    %c0_12 = arith.constant 0 : index
    %c0_13 = arith.constant 0 : index
    %46 = vector.load %arg2[%c0_11, %c0_12, %c0_13] : memref<2x8x72xf32, #tpu.memory_space<vmem>>, vector<1x8x72xf32>
    %47 = vector.shape_cast %46 : vector<1x8x72xf32> to vector<8x72xf32>
    %c0_14 = arith.constant 0 : index
    %c0_15 = arith.constant 0 : index
    %c0_16 = arith.constant 0 : index
    %48 = vector.load %arg3[%c0_14, %c0_15, %c0_16] : memref<10x8x1xf32, #tpu.memory_space<vmem>>, vector<1x8x1xf32>
    %49 = vector.shape_cast %48 : vector<1x8x1xf32> to vector<8x1xf32>
    %c1 = arith.constant 1 : index
    %c0_17 = arith.constant 0 : index
    %c0_18 = arith.constant 0 : index
    %50 = vector.load %arg3[%c1, %c0_17, %c0_18] : memref<10x8x1xf32, #tpu.memory_space<vmem>>, vector<1x8x1xf32>
    %51 = vector.shape_cast %50 : vector<1x8x1xf32> to vector<8x1xf32>
    %c4 = arith.constant 4 : index
    %c0_19 = arith.constant 0 : index
    %c0_20 = arith.constant 0 : index
    %52 = vector.load %arg3[%c4, %c0_19, %c0_20] : memref<10x8x1xf32, #tpu.memory_space<vmem>>, vector<1x8x1xf32>
    %53 = vector.shape_cast %52 : vector<1x8x1xf32> to vector<8x1xf32>
    %c5 = arith.constant 5 : index
    %c0_21 = arith.constant 0 : index
    %c0_22 = arith.constant 0 : index
    %54 = vector.load %arg3[%c5, %c0_21, %c0_22] : memref<10x8x1xf32, #tpu.memory_space<vmem>>, vector<1x8x1xf32>
    %55 = vector.shape_cast %54 : vector<1x8x1xf32> to vector<8x1xf32>
    %c6 = arith.constant 6 : index
    %c0_23 = arith.constant 0 : index
    %c0_24 = arith.constant 0 : index
    %56 = vector.load %arg3[%c6, %c0_23, %c0_24] : memref<10x8x1xf32, #tpu.memory_space<vmem>>, vector<1x8x1xf32>
    %57 = vector.shape_cast %56 : vector<1x8x1xf32> to vector<8x1xf32>
    %c17_i32 = arith.constant 17 : i32
    %58 = tpu.dynamic_rotate %0 by %c17_i32 dim 1 : vector<8x256xf32>, i32 -> vector<8x256xf32>
    %cst_25 = arith.constant 0.000000e+00 : f32
    %59 = vector.shape_cast %8 : vector<1x256xi1> to vector<1x256xi1>
    %60 = vector.broadcast %59 : vector<1x256xi1> to vector<8x256xi1>
    %61 = vector.broadcast %cst_25 : f32 to vector<8x256xf32>
    %62 = arith.select %60, %58, %61 : vector<8x256xi1>, vector<8x256xf32>
    %c16_i32_26 = arith.constant 16 : i32
    %63 = tpu.dynamic_rotate %0 by %c16_i32_26 dim 1 : vector<8x256xf32>, i32 -> vector<8x256xf32>
    %cst_27 = arith.constant 0.000000e+00 : f32
    %64 = vector.shape_cast %10 : vector<1x256xi1> to vector<1x256xi1>
    %65 = vector.broadcast %64 : vector<1x256xi1> to vector<8x256xi1>
    %66 = vector.broadcast %cst_27 : f32 to vector<8x256xf32>
    %67 = arith.select %65, %63, %66 : vector<8x256xi1>, vector<8x256xf32>
    %c15_i32_28 = arith.constant 15 : i32
    %68 = tpu.dynamic_rotate %0 by %c15_i32_28 dim 1 : vector<8x256xf32>, i32 -> vector<8x256xf32>
    %cst_29 = arith.constant 0.000000e+00 : f32
    %69 = vector.shape_cast %15 : vector<1x256xi1> to vector<1x256xi1>
    %70 = vector.broadcast %69 : vector<1x256xi1> to vector<8x256xi1>
    %71 = vector.broadcast %cst_29 : f32 to vector<8x256xf32>
    %72 = arith.select %70, %68, %71 : vector<8x256xi1>, vector<8x256xf32>
    %c1_i32_30 = arith.constant 1 : i32
    %73 = tpu.dynamic_rotate %0 by %c1_i32_30 dim 1 : vector<8x256xf32>, i32 -> vector<8x256xf32>
    %cst_31 = arith.constant 0.000000e+00 : f32
    %74 = vector.shape_cast %17 : vector<1x256xi1> to vector<1x256xi1>
    %75 = vector.broadcast %74 : vector<1x256xi1> to vector<8x256xi1>
    %76 = vector.broadcast %cst_31 : f32 to vector<8x256xf32>
    %77 = arith.select %75, %73, %76 : vector<8x256xi1>, vector<8x256xf32>
    %c255_i32 = arith.constant 255 : i32
    %78 = tpu.dynamic_rotate %0 by %c255_i32 dim 1 : vector<8x256xf32>, i32 -> vector<8x256xf32>
    %cst_32 = arith.constant 0.000000e+00 : f32
    %79 = vector.shape_cast %19 : vector<1x256xi1> to vector<1x256xi1>
    %80 = vector.broadcast %79 : vector<1x256xi1> to vector<8x256xi1>
    %81 = vector.broadcast %cst_32 : f32 to vector<8x256xf32>
    %82 = arith.select %80, %78, %81 : vector<8x256xi1>, vector<8x256xf32>
    %c241_i32 = arith.constant 241 : i32
    %83 = tpu.dynamic_rotate %0 by %c241_i32 dim 1 : vector<8x256xf32>, i32 -> vector<8x256xf32>
    %cst_33 = arith.constant 0.000000e+00 : f32
    %84 = vector.shape_cast %24 : vector<1x256xi1> to vector<1x256xi1>
    %85 = vector.broadcast %84 : vector<1x256xi1> to vector<8x256xi1>
    %86 = vector.broadcast %cst_33 : f32 to vector<8x256xf32>
    %87 = arith.select %85, %83, %86 : vector<8x256xi1>, vector<8x256xf32>
    %c240_i32_34 = arith.constant 240 : i32
    %88 = tpu.dynamic_rotate %0 by %c240_i32_34 dim 1 : vector<8x256xf32>, i32 -> vector<8x256xf32>
    %cst_35 = arith.constant 0.000000e+00 : f32
    %89 = vector.shape_cast %26 : vector<1x256xi1> to vector<1x256xi1>
    %90 = vector.broadcast %89 : vector<1x256xi1> to vector<8x256xi1>
    %91 = vector.broadcast %cst_35 : f32 to vector<8x256xf32>
    %92 = arith.select %90, %88, %91 : vector<8x256xi1>, vector<8x256xf32>
    %c239_i32 = arith.constant 239 : i32
    %93 = tpu.dynamic_rotate %0 by %c239_i32 dim 1 : vector<8x256xf32>, i32 -> vector<8x256xf32>
    %cst_36 = arith.constant 0.000000e+00 : f32
    %94 = vector.shape_cast %31 : vector<1x256xi1> to vector<1x256xi1>
    %95 = vector.broadcast %94 : vector<1x256xi1> to vector<8x256xi1>
    %96 = vector.broadcast %cst_36 : f32 to vector<8x256xf32>
    %97 = arith.select %95, %93, %96 : vector<8x256xi1>, vector<8x256xf32>
    %98 = tpu.concatenate %62, %67, %72, %77, %0, %82, %87, %92, %97 in 0 : vector<8x256xf32>, vector<8x256xf32>, vector<8x256xf32>, vector<8x256xf32>, vector<8x256xf32>, vector<8x256xf32>, vector<8x256xf32>, vector<8x256xf32>, vector<8x256xf32> -> vector<72x256xf32>
    %cst_37 = arith.constant dense<0.000000e+00> : vector<8x256xf32>
    %99 = tpu.matmul %47, %98, %cst_37 {dimension_numbers = #tpu.dot_dimension_numbers<[1], [0], [0], [1], [0, 0, 1, 1], [], []>} : vector<8x72xf32>, vector<72x256xf32>, vector<8x256xf32> -> vector<8x256xf32>
    %100 = arith.mulf %53, %49 : vector<8x1xf32>
    %101 = arith.addf %100, %51 : vector<8x1xf32>
    %102 = vector.broadcast %49 : vector<8x1xf32> to vector<8x256xf32>
    %103 = arith.mulf %99, %102 : vector<8x256xf32>
    %104 = vector.broadcast %101 : vector<8x1xf32> to vector<8x256xf32>
    %105 = arith.addf %103, %104 : vector<8x256xf32>
    %106 = arith.mulf %105, %105 : vector<8x256xf32>
    %107 = tpu.concatenate %105, %106 in 1 : vector<8x256xf32>, vector<8x256xf32> -> vector<8x512xf32>
    %cst_38 = arith.constant dense<0.000000e+00> : vector<8x512xf32>
    %108 = tpu.matmul %45, %107, %cst_38 {dimension_numbers = #tpu.dot_dimension_numbers<[1], [0], [0], [1], [0, 0, 1, 1], [], []>} : vector<8x8xf32>, vector<8x512xf32>, vector<8x512xf32> -> vector<8x512xf32>
    %109 = vector.extract_strided_slice %108 {offsets = [0, 0], sizes = [8, 256], strides = [1, 1]} : vector<8x512xf32> to vector<8x256xf32>
    %cst_39 = arith.constant dense<0.000000e+00> : vector<8xf32>
    %110 = vector.multi_reduction <add>, %109, %cst_39 [1] : vector<8x256xf32> to vector<8xf32>
    %111 = vector.shape_cast %110 : vector<8xf32> to vector<8x1xf32>
    %cst_40 = arith.constant 0.001953125 : f32
    %112 = vector.broadcast %cst_40 : f32 to vector<8x1xf32>
    %113 = arith.mulf %111, %112 : vector<8x1xf32>
    %114 = vector.extract_strided_slice %108 {offsets = [0, 256], sizes = [8, 256], strides = [1, 1]} : vector<8x512xf32> to vector<8x256xf32>
    %cst_41 = arith.constant dense<0.000000e+00> : vector<8xf32>
    %115 = vector.multi_reduction <add>, %114, %cst_41 [1] : vector<8x256xf32> to vector<8xf32>
    %116 = vector.shape_cast %115 : vector<8xf32> to vector<8x1xf32>
    %cst_42 = arith.constant 0.001953125 : f32
    %117 = vector.broadcast %cst_42 : f32 to vector<8x1xf32>
    %118 = arith.mulf %116, %117 : vector<8x1xf32>
    %119 = arith.mulf %113, %113 : vector<8x1xf32>
    %120 = arith.subf %118, %119 : vector<8x1xf32>
    %cst_43 = arith.constant 9.99999974E-6 : f32
    %121 = vector.broadcast %cst_43 : f32 to vector<8x1xf32>
    %122 = arith.addf %120, %121 : vector<8x1xf32>
    %123 = math.rsqrt %122 : vector<8x1xf32>
    %124 = arith.mulf %55, %123 : vector<8x1xf32>
    %125 = arith.mulf %113, %124 : vector<8x1xf32>
    %126 = arith.subf %57, %125 : vector<8x1xf32>
    %127 = vector.broadcast %124 : vector<8x1xf32> to vector<8x256xf32>
    %128 = arith.mulf %105, %127 : vector<8x256xf32>
    %129 = vector.broadcast %126 : vector<8x1xf32> to vector<8x256xf32>
    %130 = arith.addf %128, %129 : vector<8x256xf32>
    %cst_44 = arith.constant 0.000000e+00 : f32
    %131 = vector.broadcast %cst_44 : f32 to vector<8x256xf32>
    %132 = arith.maximumf %130, %131 : vector<8x256xf32>
    %c1_45 = arith.constant 1 : index
    %c0_46 = arith.constant 0 : index
    %c0_47 = arith.constant 0 : index
    %133 = vector.load %arg2[%c1_45, %c0_46, %c0_47] : memref<2x8x72xf32, #tpu.memory_space<vmem>>, vector<1x8x72xf32>
    %134 = vector.shape_cast %133 : vector<1x8x72xf32> to vector<8x72xf32>
    %c2 = arith.constant 2 : index
    %c0_48 = arith.constant 0 : index
    %c0_49 = arith.constant 0 : index
    %135 = vector.load %arg3[%c2, %c0_48, %c0_49] : memref<10x8x1xf32, #tpu.memory_space<vmem>>, vector<1x8x1xf32>
    %136 = vector.shape_cast %135 : vector<1x8x1xf32> to vector<8x1xf32>
    %c3 = arith.constant 3 : index
    %c0_50 = arith.constant 0 : index
    %c0_51 = arith.constant 0 : index
    %137 = vector.load %arg3[%c3, %c0_50, %c0_51] : memref<10x8x1xf32, #tpu.memory_space<vmem>>, vector<1x8x1xf32>
    %138 = vector.shape_cast %137 : vector<1x8x1xf32> to vector<8x1xf32>
    %c7 = arith.constant 7 : index
    %c0_52 = arith.constant 0 : index
    %c0_53 = arith.constant 0 : index
    %139 = vector.load %arg3[%c7, %c0_52, %c0_53] : memref<10x8x1xf32, #tpu.memory_space<vmem>>, vector<1x8x1xf32>
    %140 = vector.shape_cast %139 : vector<1x8x1xf32> to vector<8x1xf32>
    %c8 = arith.constant 8 : index
    %c0_54 = arith.constant 0 : index
    %c0_55 = arith.constant 0 : index
    %141 = vector.load %arg3[%c8, %c0_54, %c0_55] : memref<10x8x1xf32, #tpu.memory_space<vmem>>, vector<1x8x1xf32>
    %142 = vector.shape_cast %141 : vector<1x8x1xf32> to vector<8x1xf32>
    %c9 = arith.constant 9 : index
    %c0_56 = arith.constant 0 : index
    %c0_57 = arith.constant 0 : index
    %143 = vector.load %arg3[%c9, %c0_56, %c0_57] : memref<10x8x1xf32, #tpu.memory_space<vmem>>, vector<1x8x1xf32>
    %144 = vector.shape_cast %143 : vector<1x8x1xf32> to vector<8x1xf32>
    %c17_i32_58 = arith.constant 17 : i32
    %145 = tpu.dynamic_rotate %132 by %c17_i32_58 dim 1 : vector<8x256xf32>, i32 -> vector<8x256xf32>
    %cst_59 = arith.constant 0.000000e+00 : f32
    %146 = vector.shape_cast %8 : vector<1x256xi1> to vector<1x256xi1>
    %147 = vector.broadcast %146 : vector<1x256xi1> to vector<8x256xi1>
    %148 = vector.broadcast %cst_59 : f32 to vector<8x256xf32>
    %149 = arith.select %147, %145, %148 : vector<8x256xi1>, vector<8x256xf32>
    %c16_i32_60 = arith.constant 16 : i32
    %150 = tpu.dynamic_rotate %132 by %c16_i32_60 dim 1 : vector<8x256xf32>, i32 -> vector<8x256xf32>
    %cst_61 = arith.constant 0.000000e+00 : f32
    %151 = vector.shape_cast %10 : vector<1x256xi1> to vector<1x256xi1>
    %152 = vector.broadcast %151 : vector<1x256xi1> to vector<8x256xi1>
    %153 = vector.broadcast %cst_61 : f32 to vector<8x256xf32>
    %154 = arith.select %152, %150, %153 : vector<8x256xi1>, vector<8x256xf32>
    %c15_i32_62 = arith.constant 15 : i32
    %155 = tpu.dynamic_rotate %132 by %c15_i32_62 dim 1 : vector<8x256xf32>, i32 -> vector<8x256xf32>
    %cst_63 = arith.constant 0.000000e+00 : f32
    %156 = vector.shape_cast %15 : vector<1x256xi1> to vector<1x256xi1>
    %157 = vector.broadcast %156 : vector<1x256xi1> to vector<8x256xi1>
    %158 = vector.broadcast %cst_63 : f32 to vector<8x256xf32>
    %159 = arith.select %157, %155, %158 : vector<8x256xi1>, vector<8x256xf32>
    %c1_i32_64 = arith.constant 1 : i32
    %160 = tpu.dynamic_rotate %132 by %c1_i32_64 dim 1 : vector<8x256xf32>, i32 -> vector<8x256xf32>
    %cst_65 = arith.constant 0.000000e+00 : f32
    %161 = vector.shape_cast %17 : vector<1x256xi1> to vector<1x256xi1>
    %162 = vector.broadcast %161 : vector<1x256xi1> to vector<8x256xi1>
    %163 = vector.broadcast %cst_65 : f32 to vector<8x256xf32>
    %164 = arith.select %162, %160, %163 : vector<8x256xi1>, vector<8x256xf32>
    %c255_i32_66 = arith.constant 255 : i32
    %165 = tpu.dynamic_rotate %132 by %c255_i32_66 dim 1 : vector<8x256xf32>, i32 -> vector<8x256xf32>
    %cst_67 = arith.constant 0.000000e+00 : f32
    %166 = vector.shape_cast %19 : vector<1x256xi1> to vector<1x256xi1>
    %167 = vector.broadcast %166 : vector<1x256xi1> to vector<8x256xi1>
    %168 = vector.broadcast %cst_67 : f32 to vector<8x256xf32>
    %169 = arith.select %167, %165, %168 : vector<8x256xi1>, vector<8x256xf32>
    %c241_i32_68 = arith.constant 241 : i32
    %170 = tpu.dynamic_rotate %132 by %c241_i32_68 dim 1 : vector<8x256xf32>, i32 -> vector<8x256xf32>
    %cst_69 = arith.constant 0.000000e+00 : f32
    %171 = vector.shape_cast %24 : vector<1x256xi1> to vector<1x256xi1>
    %172 = vector.broadcast %171 : vector<1x256xi1> to vector<8x256xi1>
    %173 = vector.broadcast %cst_69 : f32 to vector<8x256xf32>
    %174 = arith.select %172, %170, %173 : vector<8x256xi1>, vector<8x256xf32>
    %c240_i32_70 = arith.constant 240 : i32
    %175 = tpu.dynamic_rotate %132 by %c240_i32_70 dim 1 : vector<8x256xf32>, i32 -> vector<8x256xf32>
    %cst_71 = arith.constant 0.000000e+00 : f32
    %176 = vector.shape_cast %26 : vector<1x256xi1> to vector<1x256xi1>
    %177 = vector.broadcast %176 : vector<1x256xi1> to vector<8x256xi1>
    %178 = vector.broadcast %cst_71 : f32 to vector<8x256xf32>
    %179 = arith.select %177, %175, %178 : vector<8x256xi1>, vector<8x256xf32>
    %c239_i32_72 = arith.constant 239 : i32
    %180 = tpu.dynamic_rotate %132 by %c239_i32_72 dim 1 : vector<8x256xf32>, i32 -> vector<8x256xf32>
    %cst_73 = arith.constant 0.000000e+00 : f32
    %181 = vector.shape_cast %31 : vector<1x256xi1> to vector<1x256xi1>
    %182 = vector.broadcast %181 : vector<1x256xi1> to vector<8x256xi1>
    %183 = vector.broadcast %cst_73 : f32 to vector<8x256xf32>
    %184 = arith.select %182, %180, %183 : vector<8x256xi1>, vector<8x256xf32>
    %185 = tpu.concatenate %149, %154, %159, %164, %132, %169, %174, %179, %184 in 0 : vector<8x256xf32>, vector<8x256xf32>, vector<8x256xf32>, vector<8x256xf32>, vector<8x256xf32>, vector<8x256xf32>, vector<8x256xf32>, vector<8x256xf32>, vector<8x256xf32> -> vector<72x256xf32>
    %cst_74 = arith.constant dense<0.000000e+00> : vector<8x256xf32>
    %186 = tpu.matmul %134, %185, %cst_74 {dimension_numbers = #tpu.dot_dimension_numbers<[1], [0], [0], [1], [0, 0, 1, 1], [], []>} : vector<8x72xf32>, vector<72x256xf32>, vector<8x256xf32> -> vector<8x256xf32>
    %187 = arith.mulf %140, %136 : vector<8x1xf32>
    %188 = arith.addf %187, %138 : vector<8x1xf32>
    %189 = vector.broadcast %136 : vector<8x1xf32> to vector<8x256xf32>
    %190 = arith.mulf %186, %189 : vector<8x256xf32>
    %191 = vector.broadcast %188 : vector<8x1xf32> to vector<8x256xf32>
    %192 = arith.addf %190, %191 : vector<8x256xf32>
    %193 = arith.mulf %192, %192 : vector<8x256xf32>
    %194 = tpu.concatenate %192, %193 in 1 : vector<8x256xf32>, vector<8x256xf32> -> vector<8x512xf32>
    %cst_75 = arith.constant dense<0.000000e+00> : vector<8x512xf32>
    %195 = tpu.matmul %45, %194, %cst_75 {dimension_numbers = #tpu.dot_dimension_numbers<[1], [0], [0], [1], [0, 0, 1, 1], [], []>} : vector<8x8xf32>, vector<8x512xf32>, vector<8x512xf32> -> vector<8x512xf32>
    %196 = vector.extract_strided_slice %195 {offsets = [0, 0], sizes = [8, 256], strides = [1, 1]} : vector<8x512xf32> to vector<8x256xf32>
    %cst_76 = arith.constant dense<0.000000e+00> : vector<8xf32>
    %197 = vector.multi_reduction <add>, %196, %cst_76 [1] : vector<8x256xf32> to vector<8xf32>
    %198 = vector.shape_cast %197 : vector<8xf32> to vector<8x1xf32>
    %cst_77 = arith.constant 0.001953125 : f32
    %199 = vector.broadcast %cst_77 : f32 to vector<8x1xf32>
    %200 = arith.mulf %198, %199 : vector<8x1xf32>
    %201 = vector.extract_strided_slice %195 {offsets = [0, 256], sizes = [8, 256], strides = [1, 1]} : vector<8x512xf32> to vector<8x256xf32>
    %cst_78 = arith.constant dense<0.000000e+00> : vector<8xf32>
    %202 = vector.multi_reduction <add>, %201, %cst_78 [1] : vector<8x256xf32> to vector<8xf32>
    %203 = vector.shape_cast %202 : vector<8xf32> to vector<8x1xf32>
    %cst_79 = arith.constant 0.001953125 : f32
    %204 = vector.broadcast %cst_79 : f32 to vector<8x1xf32>
    %205 = arith.mulf %203, %204 : vector<8x1xf32>
    %206 = arith.mulf %200, %200 : vector<8x1xf32>
    %207 = arith.subf %205, %206 : vector<8x1xf32>
    %cst_80 = arith.constant 9.99999974E-6 : f32
    %208 = vector.broadcast %cst_80 : f32 to vector<8x1xf32>
    %209 = arith.addf %207, %208 : vector<8x1xf32>
    %210 = math.rsqrt %209 : vector<8x1xf32>
    %211 = arith.mulf %142, %210 : vector<8x1xf32>
    %212 = arith.mulf %200, %211 : vector<8x1xf32>
    %213 = arith.subf %144, %212 : vector<8x1xf32>
    %214 = vector.broadcast %211 : vector<8x1xf32> to vector<8x256xf32>
    %215 = arith.mulf %192, %214 : vector<8x256xf32>
    %216 = vector.broadcast %213 : vector<8x1xf32> to vector<8x256xf32>
    %217 = arith.addf %215, %216 : vector<8x256xf32>
    %c0_81 = arith.constant 0 : index
    %c0_82 = arith.constant 0 : index
    %218 = vector.load %arg4[%c0_81, %c0_82] : memref<8x256xf32, #tpu.memory_space<vmem>>, vector<8x256xf32>
    tpu.vector_store %arg4[%c0_81, %c0_82], %217 {strides = array<i32>} : memref<8x256xf32, #tpu.memory_space<vmem>>, vector<8x256xf32>,
    return
  }
  func.func @transform_0(%arg0: i32) -> (i32, i32) {
    %c0_i32 = arith.constant 0 : i32
    %c0_i32_0 = arith.constant 0 : i32
    %c0_i32_1 = arith.constant 0 : i32
    return %c0_i32, %c0_i32_0 : i32, i32
  }
  func.func @transform_1(%arg0: i32) -> (i32, i32, i32) {
    %c0_i32 = arith.constant 0 : i32
    %c0_i32_0 = arith.constant 0 : i32
    %c0_i32_1 = arith.constant 0 : i32
    %c0_i32_2 = arith.constant 0 : i32
    return %c0_i32, %c0_i32_0, %c0_i32_1 : i32, i32, i32
  }
  func.func @transform_2(%arg0: i32) -> (i32, i32, i32) {
    %c0_i32 = arith.constant 0 : i32
    %c0_i32_0 = arith.constant 0 : i32
    %c0_i32_1 = arith.constant 0 : i32
    %c0_i32_2 = arith.constant 0 : i32
    return %c0_i32, %c0_i32_0, %c0_i32_1 : i32, i32, i32
  }
  func.func @transform_3(%arg0: i32) -> (i32, i32) {
    %c0_i32 = arith.constant 0 : i32
    %c0_i32_0 = arith.constant 0 : i32
    %c0_i32_1 = arith.constant 0 : i32
    return %c0_i32, %c0_i32_0 : i32, i32
  }
}

</mosaic_0001>

<llo_original>
// kernel: base_block_forward.1
$region0: #{base_block_forward.1}
  #allocation0 [shape = 'u32[]', space=smem, size = 0x4, offset = 0x4, fixed_abs, tag = 'smem constant byte address 0x4 - core index']
  #allocation1 [shape = 'u32[144,128]{1,0:T(1,128)}', space=vmem, size = 0x12000, scoped, tag = 'internal scratch']
  %s0 = inlined_call_operand.vmem [shape: f32[8,256], index: 0, kind: input, shape index: {}]
  %s1 = inlined_call_operand.vmem [shape: f32[2,8,72], index: 1, kind: input, shape index: {}]
  %s2 = inlined_call_operand.vmem [shape: f32[10,8,1], index: 2, kind: input, shape index: {}]
  %s3 = inlined_call_operand.vmem [shape: f32[8,256], index: 3, kind: output, shape index: {}]
  %s4 = sld [smem:[#allocation0]]
  $region22: #{base_block_forward.1} parent=0
    _
  %s6 = ssub.s32 1, %s4
  %s7 = scalar_select 0, %s6, %s4
  // Predicated region
  $region2: #{base_block_forward.1} parent=0 // pred_check
    _
  $region3: #{base_block_forward.1} parent=0 // pred_check_branch
    %9 = sbr.rel (0) target = $region5
  $region4: #{base_block_forward.1} parent=0 // pred_region
    _
  $region5: #{base_block_forward.1} parent=0 // pred_fallthru
    _
  // Predicated region
  $region6: #{base_block_forward.1} parent=0 // pred_check
    _
  $region7: #{base_block_forward.1} parent=0 // pred_check_branch
    %11 = sbr.rel (0) target = $region9
  $region8: #{base_block_forward.1} parent=0 // pred_region
    _
  $region9: #{base_block_forward.1} parent=0 // pred_fallthru
    _
  // Predicated region
  $region10: #{base_block_forward.1} parent=0 // pred_check
    _
  $region11: #{base_block_forward.1} parent=0 // pred_check_branch
    %13 = sbr.rel (0) target = $region13
  $region12: #{base_block_forward.1} parent=0 // pred_region
    _
  $region13: #{base_block_forward.1} parent=0 // pred_fallthru
    _
  %v14 = vld [vmem:[%s0] sm:$0xff]
  %v15 = vld [vmem:[%s0 + $0x8] sm:$0xff]
  %v16 = vlaneseq
  %v17 = vand.u32 %v16, 127
  %v18 = vadd.s32 %v17, 128
  %v19 = vand.u32 %v17, 15
  %v20 = vand.u32 %v18, 15
  %vm21 = vcmp.ge.s32.totalorder %v17, 16
  %vm22 = vcmp.ge.s32.totalorder %v18, 16
  %vm23 = vcmp.ge.s32.totalorder %v19, 1
  %vm24 = vcmp.ge.s32.totalorder %v20, 1
  %vm25 = vmand %vm21, %vm23
  %vm26 = vmand %vm22, %vm24
  %vm27 = vcmp.lt.s32.totalorder %v19, 15
  %vm28 = vcmp.lt.s32.totalorder %v20, 15
  %vm29 = vmand %vm21, %vm27
  %vm30 = vmand %vm22, %vm28
  %vm31 = vcmp.lt.s32.totalorder %v17, 240
  %vm32 = vcmp.lt.s32.totalorder %v18, 240
  %vm33 = vmand %vm31, %vm23
  %vm34 = vmand %vm32, %vm24
  %vm35 = vmand %vm31, %vm27
  %vm36 = vmand %vm32, %vm28
  %v37 = vlaneseq
  %v38 = vshrl.u32 %v37, 7
  %v39 = vsub.s32 %v38, %v17
  %vm40 = vcmp.eq.s32.totalorder %v39, 0
  %vm41 = vcmp.eq.s32.totalorder %v39, 4
  %vm42 = vmor %vm40, %vm41
  %vm43 = vcmp.eq.s32.totalorder %v39, 4294967292
  %vm44 = vmor %vm42, %vm43
  %v45 = vsel %vm44, 1.0, 0.0
  %v46 = vld [vmem:[%s1] sm:$0xff]
  %v47 = vld [vmem:[%s2] sm:$0xff]
  %s48 = scalar_lea.vmem %s2, 8
  %v49 = vld [vmem:[%s48] sm:$0xff]
  %s50 = scalar_lea.vmem %s2, 32
  %v51 = vld [vmem:[%s50] sm:$0xff]
  %s52 = scalar_lea.vmem %s2, 40
  %v53 = vld [vmem:[%s52] sm:$0xff]
  %s54 = scalar_lea.vmem %s2, 48
  %v55 = vld [vmem:[%s54] sm:$0xff]
  %56 = vrot.lane.b32.xlu0 %v14, 17
  %v57 = vpop.permute.xlu0 %56
  %58 = vrot.lane.b32.xlu0 %v15, 17
  %v59 = vpop.permute.xlu0 %58
  %vm60 = vcmp.lt.s32.totalorder %v17, 17
  %v61 = vsel %vm60, %v57, %v59
  %v62 = vsel %vm60, %v59, %v57
  %v63 = vsel %vm25, 1, 0
  %v64 = vsel %vm26, 1, 0
  %vm65 = vcmp.eq.s32.totalorder %v63, 1
  %vm66 = vcmp.eq.s32.totalorder %v64, 1
  %v67 = vsel %vm65, %v62, 0.0
  %v68 = vsel %vm66, %v61, 0.0
  %69 = vrot.lane.b32.xlu0 %v14, 16
  %v70 = vpop.permute.xlu0 %69
  %71 = vrot.lane.b32.xlu0 %v15, 16
  %v72 = vpop.permute.xlu0 %71
  %vm73 = vcmp.lt.s32.totalorder %v17, 16
  %v74 = vsel %vm73, %v70, %v72
  %v75 = vsel %vm73, %v72, %v70
  %v76 = vsel %vm21, 1, 0
  %v77 = vsel %vm22, 1, 0
  %vm78 = vcmp.eq.s32.totalorder %v76, 1
  %vm79 = vcmp.eq.s32.totalorder %v77, 1
  %v80 = vsel %vm78, %v75, 0.0
  %v81 = vsel %vm79, %v74, 0.0
  %82 = vrot.lane.b32.xlu0 %v14, 15
  %v83 = vpop.permute.xlu0 %82
  %84 = vrot.lane.b32.xlu0 %v15, 15
  %v85 = vpop.permute.xlu0 %84
  %vm86 = vcmp.lt.s32.totalorder %v17, 15
  %v87 = vsel %vm86, %v83, %v85
  %v88 = vsel %vm86, %v85, %v83
  %v89 = vsel %vm29, 1, 0
  %v90 = vsel %vm30, 1, 0
  %vm91 = vcmp.eq.s32.totalorder %v89, 1
  %vm92 = vcmp.eq.s32.totalorder %v90, 1
  %v93 = vsel %vm91, %v88, 0.0
  %v94 = vsel %vm92, %v87, 0.0
  %95 = vrot.lane.b32.xlu0 %v14, 1
  %v96 = vpop.permute.xlu0 %95
  %97 = vrot.lane.b32.xlu0 %v15, 1
  %v98 = vpop.permute.xlu0 %97
  %vm99 = vcmp.lt.s32.totalorder %v17, 1
  %v100 = vsel %vm99, %v96, %v98
  %v101 = vsel %vm99, %v98, %v96
  %v102 = vsel %vm23, 1, 0
  %v103 = vsel %vm24, 1, 0
  %vm104 = vcmp.eq.s32.totalorder %v102, 1
  %vm105 = vcmp.eq.s32.totalorder %v103, 1
  %v106 = vsel %vm104, %v101, 0.0
  %v107 = vsel %vm105, %v100, 0.0
  %108 = vrot.lane.b32.xlu0 %v14, 127
  %v109 = vpop.permute.xlu0 %108
  %110 = vrot.lane.b32.xlu0 %v15, 127
  %v111 = vpop.permute.xlu0 %110
  %vm112 = vcmp.lt.s32.totalorder %v17, 127
  %v113 = vsel %vm112, %v109, %v111
  %v114 = vsel %vm112, %v111, %v109
  %v115 = vsel %vm27, 1, 0
  %v116 = vsel %vm28, 1, 0
  %vm117 = vcmp.eq.s32.totalorder %v115, 1
  %vm118 = vcmp.eq.s32.totalorder %v116, 1
  %v119 = vsel %vm117, %v113, 0.0
  %v120 = vsel %vm118, %v114, 0.0
  %121 = vrot.lane.b32.xlu0 %v14, 113
  %v122 = vpop.permute.xlu0 %121
  %123 = vrot.lane.b32.xlu0 %v15, 113
  %v124 = vpop.permute.xlu0 %123
  %vm125 = vcmp.lt.s32.totalorder %v17, 113
  %v126 = vsel %vm125, %v122, %v124
  %v127 = vsel %vm125, %v124, %v122
  %v128 = vsel %vm33, 1, 0
  %v129 = vsel %vm34, 1, 0
  %vm130 = vcmp.eq.s32.totalorder %v128, 1
  %vm131 = vcmp.eq.s32.totalorder %v129, 1
  %v132 = vsel %vm130, %v126, 0.0
  %v133 = vsel %vm131, %v127, 0.0
  %134 = vrot.lane.b32.xlu0 %v14, 112
  %v135 = vpop.permute.xlu0 %134
  %136 = vrot.lane.b32.xlu0 %v15, 112
  %v137 = vpop.permute.xlu0 %136
  %vm138 = vcmp.lt.s32.totalorder %v17, 112
  %v139 = vsel %vm138, %v135, %v137
  %v140 = vsel %vm138, %v137, %v135
  %v141 = vsel %vm31, 1, 0
  %v142 = vsel %vm32, 1, 0
  %vm143 = vcmp.eq.s32.totalorder %v141, 1
  %vm144 = vcmp.eq.s32.totalorder %v142, 1
  %v145 = vsel %vm143, %v139, 0.0
  %v146 = vsel %vm144, %v140, 0.0
  %147 = vrot.lane.b32.xlu0 %v14, 111
  %v148 = vpop.permute.xlu0 %147
  %149 = vrot.lane.b32.xlu0 %v15, 111
  %v150 = vpop.permute.xlu0 %149
  %vm151 = vcmp.lt.s32.totalorder %v17, 111
  %v152 = vsel %vm151, %v148, %v150
  %v153 = vsel %vm151, %v150, %v148
  %v154 = vsel %vm35, 1, 0
  %v155 = vsel %vm36, 1, 0
  %vm156 = vcmp.eq.s32.totalorder %v154, 1
  %vm157 = vcmp.eq.s32.totalorder %v155, 1
  %v158 = vsel %vm156, %v152, 0.0
  %v159 = vsel %vm157, %v153, 0.0
  %vm160 = vcmask 588800
  %v162 = vsel %vm160, %v46, 0
  %164 = vmatprep.subr.mxu0 %v68
  %165 = vmatpush1.msra.mxu0 %v67
  %166 = vmatprep.subr.mxu0 %v81
  %167 = vmatpush1.msra.mxu0 %v80
  %168 = vmatprep.subr.mxu0 %v94
  %169 = vmatpush1.msra.mxu0 %v93
  %170 = vmatprep.subr.mxu0 %v107
  %171 = vmatpush1.msra.mxu0 %v106
  %172 = vmatprep.subr.mxu0 %v15
  %173 = vmatpush1.msra.mxu0 %v14
  %174 = vmatprep.subr.mxu0 %v120
  %175 = vmatpush1.msra.mxu0 %v119
  %176 = vmatprep.subr.mxu0 %v133
  %177 = vmatpush1.msra.mxu0 %v132
  %178 = vmatprep.subr.mxu0 %v146
  %179 = vmatpush1.msra.mxu0 %v145
  %180 = vmatprep.subr.mxu0 %v159
  %181 = vmatpush1.msra.mxu0 %v158
  %182 = vmatprep.subr.mxu0 0.0
  %183 = vmatpush1.msra.mxu0 0.0
  %184 = vmatprep.subr.mxu0 0.0
  %185 = vmatpush1.msra.mxu0 0.0
  %186 = vmatprep.subr.mxu0 0.0
  %187 = vmatpush1.msra.mxu0 0.0
  %188 = vmatprep.subr.mxu0 0.0
  %189 = vmatpush1.msra.mxu0 0.0
  %190 = vmatprep.subr.mxu0 0.0
  %191 = vmatpush1.msra.mxu0 0.0
  %192 = vmatprep.subr.mxu0 0.0
  %193 = vmatpush1.msra.mxu0 0.0
  %194 = vmatprep.subr.mxu0 0.0
  %195 = vmatpush1.msra.mxu0 0.0
  %196 = vmatprep.subr.mxu0 0.0
  %197 = vmatpush1.msra.mxu0 0.0
  %198 = vmatprep.subr.mxu0 0.0
  %199 = vmatpush1.msra.mxu0 0.0
  %200 = vmatprep.subr.mxu0 0.0
  %201 = vmatpush1.msra.mxu0 0.0
  %202 = vmatprep.subr.mxu0 0.0
  %203 = vmatpush1.msra.mxu0 0.0
  %204 = vmatprep.subr.mxu0 0.0
  %205 = vmatpush1.msra.mxu0 0.0
  %206 = vmatprep.subr.mxu0 0.0
  %207 = vmatpush1.msra.mxu0 0.0
  %208 = vmatprep.subr.mxu0 0.0
  %209 = vmatpush1.msra.mxu0 0.0
  %210 = vmatprep.subr.mxu0 0.0
  %211 = vmatpush1.msra.mxu0 0.0
  %212 = vmatprep.subr.mxu0 0.0
  %213 = vmatpush1.msra.mxu0 0.0
  %214 = vmatprep.subr.mxu0 0.0
  %215 = vmatpush1.msra.mxu0 0.0
  %216 = vmatprep.subr.mxu0 0.0
  %217 = vmatpush1.msra.mxu0 0.0
  %218 = vmatprep.subr.mxu0 0.0
  %219 = vmatpush1.msra.mxu0 0.0
  %220 = vmatprep.subr.mxu0 0.0
  %221 = vmatpush1.msra.mxu0 0.0
  %222 = vmatprep.subr.mxu0 0.0
  %223 = vmatpush1.msra.mxu0 0.0
  %224 = vmatprep.subr.mxu0 0.0
  %225 = vmatpush1.msra.mxu0 0.0
  %226 = vmatprep.subr.mxu0 0.0
  %227 = vmatpush1.msra.mxu0 0.0
  %228 = vmatprep.mubr.f32.mxu0 0.0
  %229 = vmatmul.mubr.f32.gmra.mrb[0].mxu0 %v162
  %v230 = vpop.f32.mrb[0].mxu0
  %v231 = vadd.f32 0.0, %v230
  %v232 = vpop.f32.mrb[0].mxu0
  %v233 = vadd.f32 0.0, %v232
  %234 = vdwg.mxu0
  %v235 = vmul.f32 %v51, %v47
  %v236 = vadd.f32 %v235, %v49
  %238 = vset.pattern.permute.xlu0 0
  %239 = vperm.xlu0 %238, %v47
  %v240 = vpop.permute.xlu0 %239
  %v242 = vmul.f32 %v231, %v240
  %v243 = vmul.f32 %v233, %v240
  %245 = vset.pattern.permute.xlu0 0
  %246 = vperm.xlu0 %245, %v236
  %v247 = vpop.permute.xlu0 %246
  %v249 = vadd.f32 %v242, %v247
  %v250 = vadd.f32 %v243, %v247
  %v251 = vmul.f32 %v249, %v249
  %v252 = vmul.f32 %v250, %v250
  %vm253 = vcmask 64512
  %v255 = vsel %vm253, %v45, 0
  %257 = vmatprep.subr.mxu0 %v250
  %258 = vmatpush1.msra.mxu0 %v249
  %259 = vmatprep.subr.mxu0 0.0
  %260 = vmatpush1.msra.mxu0 0.0
  %261 = vmatprep.subr.mxu0 0.0
  %262 = vmatpush1.msra.mxu0 0.0
  %263 = vmatprep.subr.mxu0 0.0
  %264 = vmatpush1.msra.mxu0 0.0
  %265 = vmatprep.subr.mxu0 0.0
  %266 = vmatpush1.msra.mxu0 0.0
  %267 = vmatprep.subr.mxu0 0.0
  %268 = vmatpush1.msra.mxu0 0.0
  %269 = vmatprep.subr.mxu0 0.0
  %270 = vmatpush1.msra.mxu0 0.0
  %271 = vmatprep.subr.mxu0 0.0
  %272 = vmatpush1.msra.mxu0 0.0
  %273 = vmatprep.subr.mxu0 0.0
  %274 = vmatpush1.msra.mxu0 0.0
  %275 = vmatprep.subr.mxu0 0.0
  %276 = vmatpush1.msra.mxu0 0.0
  %277 = vmatprep.subr.mxu0 0.0
  %278 = vmatpush1.msra.mxu0 0.0
  %279 = vmatprep.subr.mxu0 0.0
  %280 = vmatpush1.msra.mxu0 0.0
  %281 = vmatprep.subr.mxu0 0.0
  %282 = vmatpush1.msra.mxu0 0.0
  %283 = vmatprep.subr.mxu0 0.0
  %284 = vmatpush1.msra.mxu0 0.0
  %285 = vmatprep.subr.mxu0 0.0
  %286 = vmatpush1.msra.mxu0 0.0
  %287 = vmatprep.subr.mxu0 0.0
  %288 = vmatpush1.msra.mxu0 0.0
  %289 = vmatprep.subr.mxu0 0.0
  %290 = vmatpush1.msra.mxu0 0.0
  %291 = vmatprep.subr.mxu0 0.0
  %292 = vmatpush1.msra.mxu0 0.0
  %293 = vmatprep.subr.mxu0 0.0
  %294 = vmatpush1.msra.mxu0 0.0
  %295 = vmatprep.subr.mxu0 0.0
  %296 = vmatpush1.msra.mxu0 0.0
  %297 = vmatprep.subr.mxu0 0.0
  %298 = vmatpush1.msra.mxu0 0.0
  %299 = vmatprep.subr.mxu0 0.0
  %300 = vmatpush1.msra.mxu0 0.0
  %301 = vmatprep.subr.mxu0 0.0
  %302 = vmatpush1.msra.mxu0 0.0
  %303 = vmatprep.subr.mxu0 0.0
  %304 = vmatpush1.msra.mxu0 0.0
  %305 = vmatprep.subr.mxu0 0.0
  %306 = vmatpush1.msra.mxu0 0.0
  %307 = vmatprep.subr.mxu0 0.0
  %308 = vmatpush1.msra.mxu0 0.0
  %309 = vmatprep.subr.mxu0 0.0
  %310 = vmatpush1.msra.mxu0 0.0
  %311 = vmatprep.subr.mxu0 0.0
  %312 = vmatpush1.msra.mxu0 0.0
  %313 = vmatprep.subr.mxu0 0.0
  %314 = vmatpush1.msra.mxu0 0.0
  %315 = vmatprep.subr.mxu0 0.0
  %316 = vmatpush1.msra.mxu0 0.0
  %317 = vmatprep.subr.mxu0 0.0
  %318 = vmatpush1.msra.mxu0 0.0
  %319 = vmatprep.subr.mxu0 0.0
  %320 = vmatpush1.msra.mxu0 0.0
  %321 = vmatprep.mubr.f32.mxu0 0.0
  %322 = vmatmul.mubr.f32.gmra.mrb[0].mxu0 %v255
  %v323 = vpop.f32.mrb[0].mxu0
  %v324 = vadd.f32 0.0, %v323
  %v325 = vpop.f32.mrb[0].mxu0
  %v326 = vadd.f32 0.0, %v325
  %327 = vdwg.mxu0
  %328 = vmatprep.subr.mxu0 %v252
  %329 = vmatpush1.msra.mxu0 %v251
  %330 = vmatprep.subr.mxu0 0.0
  %331 = vmatpush1.msra.mxu0 0.0
  %332 = vmatprep.subr.mxu0 0.0
  %333 = vmatpush1.msra.mxu0 0.0
  %334 = vmatprep.subr.mxu0 0.0
  %335 = vmatpush1.msra.mxu0 0.0
  %336 = vmatprep.subr.mxu0 0.0
  %337 = vmatpush1.msra.mxu0 0.0
  %338 = vmatprep.subr.mxu0 0.0
  %339 = vmatpush1.msra.mxu0 0.0
  %340 = vmatprep.subr.mxu0 0.0
  %341 = vmatpush1.msra.mxu0 0.0
  %342 = vmatprep.subr.mxu0 0.0
  %343 = vmatpush1.msra.mxu0 0.0
  %344 = vmatprep.subr.mxu0 0.0
  %345 = vmatpush1.msra.mxu0 0.0
  %346 = vmatprep.subr.mxu0 0.0
  %347 = vmatpush1.msra.mxu0 0.0
  %348 = vmatprep.subr.mxu0 0.0
  %349 = vmatpush1.msra.mxu0 0.0
  %350 = vmatprep.subr.mxu0 0.0
  %351 = vmatpush1.msra.mxu0 0.0
  %352 = vmatprep.subr.mxu0 0.0
  %353 = vmatpush1.msra.mxu0 0.0
  %354 = vmatprep.subr.mxu0 0.0
  %355 = vmatpush1.msra.mxu0 0.0
  %356 = vmatprep.subr.mxu0 0.0
  %357 = vmatpush1.msra.mxu0 0.0
  %358 = vmatprep.subr.mxu0 0.0
  %359 = vmatpush1.msra.mxu0 0.0
  %360 = vmatprep.subr.mxu0 0.0
  %361 = vmatpush1.msra.mxu0 0.0
  %362 = vmatprep.subr.mxu0 0.0
  %363 = vmatpush1.msra.mxu0 0.0
  %364 = vmatprep.subr.mxu0 0.0
  %365 = vmatpush1.msra.mxu0 0.0
  %366 = vmatprep.subr.mxu0 0.0
  %367 = vmatpush1.msra.mxu0 0.0
  %368 = vmatprep.subr.mxu0 0.0
  %369 = vmatpush1.msra.mxu0 0.0
  %370 = vmatprep.subr.mxu0 0.0
  %371 = vmatpush1.msra.mxu0 0.0
  %372 = vmatprep.subr.mxu0 0.0
  %373 = vmatpush1.msra.mxu0 0.0
  %374 = vmatprep.subr.mxu0 0.0
  %375 = vmatpush1.msra.mxu0 0.0
  %376 = vmatprep.subr.mxu0 0.0
  %377 = vmatpush1.msra.mxu0 0.0
  %378 = vmatprep.subr.mxu0 0.0
  %379 = vmatpush1.msra.mxu0 0.0
  %380 = vmatprep.subr.mxu0 0.0
  %381 = vmatpush1.msra.mxu0 0.0
  %382 = vmatprep.subr.mxu0 0.0
  %383 = vmatpush1.msra.mxu0 0.0
  %384 = vmatprep.subr.mxu0 0.0
  %385 = vmatpush1.msra.mxu0 0.0
  %386 = vmatprep.subr.mxu0 0.0
  %387 = vmatpush1.msra.mxu0 0.0
  %388 = vmatprep.subr.mxu0 0.0
  %389 = vmatpush1.msra.mxu0 0.0
  %390 = vmatprep.subr.mxu0 0.0
  %391 = vmatpush1.msra.mxu0 0.0
  %392 = vmatprep.mubr.f32.mxu0 0.0
  %393 = vmatmul.mubr.f32.gmra.mrb[0].mxu0 %v255
  %v394 = vpop.f32.mrb[0].mxu0
  %v395 = vadd.f32 0.0, %v394
  %v396 = vpop.f32.mrb[0].mxu0
  %v397 = vadd.f32 0.0, %v396
  %398 = vdwg.mxu0
  %v399 = vadd.f32 %v324, %v326
  %400 = vadd.xlane.f32.xlu0 %v399
  %v401 = vpop.xlane.xlu0 %400
  %v402 = vmul.f32 %v401, 0.001953125
  %v403 = vadd.f32 %v395, %v397
  %404 = vadd.xlane.f32.xlu0 %v403
  %v405 = vpop.xlane.xlu0 %404
  %v406 = vmul.f32 %v405, 0.001953125
  %v407 = vmul.f32 %v402, %v402
  %v408 = vsub.f32 %v406, %v407
  %v409 = vadd.f32 %v408, 1e-05
  %v410 = vrsqrt.pop %v409
  %v411 = vmul.f32 %v53, %v410
  %v412 = vmul.f32 %v402, %v411
  %v413 = vsub.f32 %v55, %v412
  %415 = vset.pattern.permute.xlu0 0
  %416 = vperm.xlu0 %415, %v411
  %v417 = vpop.permute.xlu0 %416
  %v419 = vmul.f32 %v249, %v417
  %v420 = vmul.f32 %v250, %v417
  %422 = vset.pattern.permute.xlu0 0
  %423 = vperm.xlu0 %422, %v413
  %v424 = vpop.permute.xlu0 %423
  %v426 = vadd.f32 %v419, %v424
  %v427 = vadd.f32 %v420, %v424
  %v428 = vmax.f32 %v426, 0.0
  %v429 = vmax.f32 %v427, 0.0
  %s430 = scalar_lea.vmem %s1, 8
  %v431 = vld [vmem:[%s430] sm:$0xff]
  %s432 = scalar_lea.vmem %s2, 16
  %v433 = vld [vmem:[%s432] sm:$0xff]
  %s434 = scalar_lea.vmem %s2, 24
  %v435 = vld [vmem:[%s434] sm:$0xff]
  %s436 = scalar_lea.vmem %s2, 56
  %v437 = vld [vmem:[%s436] sm:$0xff]
  %s438 = scalar_lea.vmem %s2, 64
  %v439 = vld [vmem:[%s438] sm:$0xff]
  %s440 = scalar_lea.vmem %s2, 72
  %v441 = vld [vmem:[%s440] sm:$0xff]
  %442 = vrot.lane.b32.xlu0 %v428, 17
  %v443 = vpop.permute.xlu0 %442
  %444 = vrot.lane.b32.xlu0 %v429, 17
  %v445 = vpop.permute.xlu0 %444
  %v446 = vsel %vm60, %v443, %v445
  %v447 = vsel %vm60, %v445, %v443
  %v448 = vsel %vm65, %v447, 0.0
  %v449 = vsel %vm66, %v446, 0.0
  %450 = vrot.lane.b32.xlu0 %v428, 16
  %v451 = vpop.permute.xlu0 %450
  %452 = vrot.lane.b32.xlu0 %v429, 16
  %v453 = vpop.permute.xlu0 %452
  %v454 = vsel %vm73, %v451, %v453
  %v455 = vsel %vm73, %v453, %v451
  %v456 = vsel %vm78, %v455, 0.0
  %v457 = vsel %vm79, %v454, 0.0
  %458 = vrot.lane.b32.xlu0 %v428, 15
  %v459 = vpop.permute.xlu0 %458
  %460 = vrot.lane.b32.xlu0 %v429, 15
  %v461 = vpop.permute.xlu0 %460
  %v462 = vsel %vm86, %v459, %v461
  %v463 = vsel %vm86, %v461, %v459
  %v464 = vsel %vm91, %v463, 0.0
  %v465 = vsel %vm92, %v462, 0.0
  %466 = vrot.lane.b32.xlu0 %v428, 1
  %v467 = vpop.permute.xlu0 %466
  %468 = vrot.lane.b32.xlu0 %v429, 1
  %v469 = vpop.permute.xlu0 %468
  %v470 = vsel %vm99, %v467, %v469
  %v471 = vsel %vm99, %v469, %v467
  %v472 = vsel %vm104, %v471, 0.0
  %v473 = vsel %vm105, %v470, 0.0
  %474 = vrot.lane.b32.xlu0 %v428, 127
  %v475 = vpop.permute.xlu0 %474
  %476 = vrot.lane.b32.xlu0 %v429, 127
  %v477 = vpop.permute.xlu0 %476
  %v478 = vsel %vm112, %v475, %v477
  %v479 = vsel %vm112, %v477, %v475
  %v480 = vsel %vm117, %v478, 0.0
  %v481 = vsel %vm118, %v479, 0.0
  %482 = vrot.lane.b32.xlu0 %v428, 113
  %v483 = vpop.permute.xlu0 %482
  %484 = vrot.lane.b32.xlu0 %v429, 113
  %v485 = vpop.permute.xlu0 %484
  %v486 = vsel %vm125, %v483, %v485
  %v487 = vsel %vm125, %v485, %v483
  %v488 = vsel %vm130, %v486, 0.0
  %v489 = vsel %vm131, %v487, 0.0
  %490 = vrot.lane.b32.xlu0 %v428, 112
  %v491 = vpop.permute.xlu0 %490
  %492 = vrot.lane.b32.xlu0 %v429, 112
  %v493 = vpop.permute.xlu0 %492
  %v494 = vsel %vm138, %v491, %v493
  %v495 = vsel %vm138, %v493, %v491
  %v496 = vsel %vm143, %v494, 0.0
  %v497 = vsel %vm144, %v495, 0.0
  %498 = vrot.lane.b32.xlu0 %v428, 111
  %v499 = vpop.permute.xlu0 %498
  %500 = vrot.lane.b32.xlu0 %v429, 111
  %v501 = vpop.permute.xlu0 %500
  %v502 = vsel %vm151, %v499, %v501
  %v503 = vsel %vm151, %v501, %v499
  %v504 = vsel %vm156, %v502, 0.0
  %v505 = vsel %vm157, %v503, 0.0
  %v507 = vsel %vm160, %v431, 0
  %509 = vmatprep.subr.mxu0 %v449
  %510 = vmatpush1.msra.mxu0 %v448
  %511 = vmatprep.subr.mxu0 %v457
  %512 = vmatpush1.msra.mxu0 %v456
  %513 = vmatprep.subr.mxu0 %v465
  %514 = vmatpush1.msra.mxu0 %v464
  %515 = vmatprep.subr.mxu0 %v473
  %516 = vmatpush1.msra.mxu0 %v472
  %517 = vmatprep.subr.mxu0 %v429
  %518 = vmatpush1.msra.mxu0 %v428
  %519 = vmatprep.subr.mxu0 %v481
  %520 = vmatpush1.msra.mxu0 %v480
  %521 = vmatprep.subr.mxu0 %v489
  %522 = vmatpush1.msra.mxu0 %v488
  %523 = vmatprep.subr.mxu0 %v497
  %524 = vmatpush1.msra.mxu0 %v496
  %525 = vmatprep.subr.mxu0 %v505
  %526 = vmatpush1.msra.mxu0 %v504
  %527 = vmatprep.subr.mxu0 0.0
  %528 = vmatpush1.msra.mxu0 0.0
  %529 = vmatprep.subr.mxu0 0.0
  %530 = vmatpush1.msra.mxu0 0.0
  %531 = vmatprep.subr.mxu0 0.0
  %532 = vmatpush1.msra.mxu0 0.0
  %533 = vmatprep.subr.mxu0 0.0
  %534 = vmatpush1.msra.mxu0 0.0
  %535 = vmatprep.subr.mxu0 0.0
  %536 = vmatpush1.msra.mxu0 0.0
  %537 = vmatprep.subr.mxu0 0.0
  %538 = vmatpush1.msra.mxu0 0.0
  %539 = vmatprep.subr.mxu0 0.0
  %540 = vmatpush1.msra.mxu0 0.0
  %541 = vmatprep.subr.mxu0 0.0
  %542 = vmatpush1.msra.mxu0 0.0
  %543 = vmatprep.subr.mxu0 0.0
  %544 = vmatpush1.msra.mxu0 0.0
  %545 = vmatprep.subr.mxu0 0.0
  %546 = vmatpush1.msra.mxu0 0.0
  %547 = vmatprep.subr.mxu0 0.0
  %548 = vmatpush1.msra.mxu0 0.0
  %549 = vmatprep.subr.mxu0 0.0
  %550 = vmatpush1.msra.mxu0 0.0
  %551 = vmatprep.subr.mxu0 0.0
  %552 = vmatpush1.msra.mxu0 0.0
  %553 = vmatprep.subr.mxu0 0.0
  %554 = vmatpush1.msra.mxu0 0.0
  %555 = vmatprep.subr.mxu0 0.0
  %556 = vmatpush1.msra.mxu0 0.0
  %557 = vmatprep.subr.mxu0 0.0
  %558 = vmatpush1.msra.mxu0 0.0
  %559 = vmatprep.subr.mxu0 0.0
  %560 = vmatpush1.msra.mxu0 0.0
  %561 = vmatprep.subr.mxu0 0.0
  %562 = vmatpush1.msra.mxu0 0.0
  %563 = vmatprep.subr.mxu0 0.0
  %564 = vmatpush1.msra.mxu0 0.0
  %565 = vmatprep.subr.mxu0 0.0
  %566 = vmatpush1.msra.mxu0 0.0
  %567 = vmatprep.subr.mxu0 0.0
  %568 = vmatpush1.msra.mxu0 0.0
  %569 = vmatprep.subr.mxu0 0.0
  %570 = vmatpush1.msra.mxu0 0.0
  %571 = vmatprep.subr.mxu0 0.0
  %572 = vmatpush1.msra.mxu0 0.0
  %573 = vmatprep.mubr.f32.mxu0 0.0
  %574 = vmatmul.mubr.f32.gmra.mrb[0].mxu0 %v507
  %v575 = vpop.f32.mrb[0].mxu0
  %v576 = vadd.f32 0.0, %v575
  %v577 = vpop.f32.mrb[0].mxu0
  %v578 = vadd.f32 0.0, %v577
  %579 = vdwg.mxu0
  %v580 = vmul.f32 %v437, %v433
  %v581 = vadd.f32 %v580, %v435
  %583 = vset.pattern.permute.xlu0 0
  %584 = vperm.xlu0 %583, %v433
  %v585 = vpop.permute.xlu0 %584
  %v587 = vmul.f32 %v576, %v585
  %v588 = vmul.f32 %v578, %v585
  %590 = vset.pattern.permute.xlu0 0
  %591 = vperm.xlu0 %590, %v581
  %v592 = vpop.permute.xlu0 %591
  %v594 = vadd.f32 %v587, %v592
  %v595 = vadd.f32 %v588, %v592
  %v596 = vmul.f32 %v594, %v594
  %v597 = vmul.f32 %v595, %v595
  %598 = vmatprep.subr.mxu0 %v595
  %599 = vmatpush1.msra.mxu0 %v594
  %600 = vmatprep.subr.mxu0 0.0
  %601 = vmatpush1.msra.mxu0 0.0
  %602 = vmatprep.subr.mxu0 0.0
  %603 = vmatpush1.msra.mxu0 0.0
  %604 = vmatprep.subr.mxu0 0.0
  %605 = vmatpush1.msra.mxu0 0.0
  %606 = vmatprep.subr.mxu0 0.0
  %607 = vmatpush1.msra.mxu0 0.0
  %608 = vmatprep.subr.mxu0 0.0
  %609 = vmatpush1.msra.mxu0 0.0
  %610 = vmatprep.subr.mxu0 0.0
  %611 = vmatpush1.msra.mxu0 0.0
  %612 = vmatprep.subr.mxu0 0.0
  %613 = vmatpush1.msra.mxu0 0.0
  %614 = vmatprep.subr.mxu0 0.0
  %615 = vmatpush1.msra.mxu0 0.0
  %616 = vmatprep.subr.mxu0 0.0
  %617 = vmatpush1.msra.mxu0 0.0
  %618 = vmatprep.subr.mxu0 0.0
  %619 = vmatpush1.msra.mxu0 0.0
  %620 = vmatprep.subr.mxu0 0.0
  %621 = vmatpush1.msra.mxu0 0.0
  %622 = vmatprep.subr.mxu0 0.0
  %623 = vmatpush1.msra.mxu0 0.0
  %624 = vmatprep.subr.mxu0 0.0
  %625 = vmatpush1.msra.mxu0 0.0
  %626 = vmatprep.subr.mxu0 0.0
  %627 = vmatpush1.msra.mxu0 0.0
  %628 = vmatprep.subr.mxu0 0.0
  %629 = vmatpush1.msra.mxu0 0.0
  %630 = vmatprep.subr.mxu0 0.0
  %631 = vmatpush1.msra.mxu0 0.0
  %632 = vmatprep.subr.mxu0 0.0
  %633 = vmatpush1.msra.mxu0 0.0
  %634 = vmatprep.subr.mxu0 0.0
  %635 = vmatpush1.msra.mxu0 0.0
  %636 = vmatprep.subr.mxu0 0.0
  %637 = vmatpush1.msra.mxu0 0.0
  %638 = vmatprep.subr.mxu0 0.0
  %639 = vmatpush1.msra.mxu0 0.0
  %640 = vmatprep.subr.mxu0 0.0
  %641 = vmatpush1.msra.mxu0 0.0
  %642 = vmatprep.subr.mxu0 0.0
  %643 = vmatpush1.msra.mxu0 0.0
  %644 = vmatprep.subr.mxu0 0.0
  %645 = vmatpush1.msra.mxu0 0.0
  %646 = vmatprep.subr.mxu0 0.0
  %647 = vmatpush1.msra.mxu0 0.0
  %648 = vmatprep.subr.mxu0 0.0
  %649 = vmatpush1.msra.mxu0 0.0
  %650 = vmatprep.subr.mxu0 0.0
  %651 = vmatpush1.msra.mxu0 0.0
  %652 = vmatprep.subr.mxu0 0.0
  %653 = vmatpush1.msra.mxu0 0.0
  %654 = vmatprep.subr.mxu0 0.0
  %655 = vmatpush1.msra.mxu0 0.0
  %656 = vmatprep.subr.mxu0 0.0
  %657 = vmatpush1.msra.mxu0 0.0
  %658 = vmatprep.subr.mxu0 0.0
  %659 = vmatpush1.msra.mxu0 0.0
  %660 = vmatprep.subr.mxu0 0.0
  %661 = vmatpush1.msra.mxu0 0.0
  %662 = vmatprep.mubr.f32.mxu0 0.0
  %663 = vmatmul.mubr.f32.gmra.mrb[0].mxu0 %v255
  %v664 = vpop.f32.mrb[0].mxu0
  %v665 = vadd.f32 0.0, %v664
  %v666 = vpop.f32.mrb[0].mxu0
  %v667 = vadd.f32 0.0, %v666
  %668 = vdwg.mxu0
  %669 = vmatprep.subr.mxu0 %v597
  %670 = vmatpush1.msra.mxu0 %v596
  %671 = vmatprep.subr.mxu0 0.0
  %672 = vmatpush1.msra.mxu0 0.0
  %673 = vmatprep.subr.mxu0 0.0
  %674 = vmatpush1.msra.mxu0 0.0
  %675 = vmatprep.subr.mxu0 0.0
  %676 = vmatpush1.msra.mxu0 0.0
  %677 = vmatprep.subr.mxu0 0.0
  %678 = vmatpush1.msra.mxu0 0.0
  %679 = vmatprep.subr.mxu0 0.0
  %680 = vmatpush1.msra.mxu0 0.0
  %681 = vmatprep.subr.mxu0 0.0
  %682 = vmatpush1.msra.mxu0 0.0
  %683 = vmatprep.subr.mxu0 0.0
  %684 = vmatpush1.msra.mxu0 0.0
  %685 = vmatprep.subr.mxu0 0.0
  %686 = vmatpush1.msra.mxu0 0.0
  %687 = vmatprep.subr.mxu0 0.0
  %688 = vmatpush1.msra.mxu0 0.0
  %689 = vmatprep.subr.mxu0 0.0
  %690 = vmatpush1.msra.mxu0 0.0
  %691 = vmatprep.subr.mxu0 0.0
  %692 = vmatpush1.msra.mxu0 0.0
  %693 = vmatprep.subr.mxu0 0.0
  %694 = vmatpush1.msra.mxu0 0.0
  %695 = vmatprep.subr.mxu0 0.0
  %696 = vmatpush1.msra.mxu0 0.0
  %697 = vmatprep.subr.mxu0 0.0
  %698 = vmatpush1.msra.mxu0 0.0
  %699 = vmatprep.subr.mxu0 0.0
  %700 = vmatpush1.msra.mxu0 0.0
  %701 = vmatprep.subr.mxu0 0.0
  %702 = vmatpush1.msra.mxu0 0.0
  %703 = vmatprep.subr.mxu0 0.0
  %704 = vmatpush1.msra.mxu0 0.0
  %705 = vmatprep.subr.mxu0 0.0
  %706 = vmatpush1.msra.mxu0 0.0
  %707 = vmatprep.subr.mxu0 0.0
  %708 = vmatpush1.msra.mxu0 0.0
  %709 = vmatprep.subr.mxu0 0.0
  %710 = vmatpush1.msra.mxu0 0.0
  %711 = vmatprep.subr.mxu0 0.0
  %712 = vmatpush1.msra.mxu0 0.0
  %713 = vmatprep.subr.mxu0 0.0
  %714 = vmatpush1.msra.mxu0 0.0
  %715 = vmatprep.subr.mxu0 0.0
  %716 = vmatpush1.msra.mxu0 0.0
  %717 = vmatprep.subr.mxu0 0.0
  %718 = vmatpush1.msra.mxu0 0.0
  %719 = vmatprep.subr.mxu0 0.0
  %720 = vmatpush1.msra.mxu0 0.0
  %721 = vmatprep.subr.mxu0 0.0
  %722 = vmatpush1.msra.mxu0 0.0
  %723 = vmatprep.subr.mxu0 0.0
  %724 = vmatpush1.msra.mxu0 0.0
  %725 = vmatprep.subr.mxu0 0.0
  %726 = vmatpush1.msra.mxu0 0.0
  %727 = vmatprep.subr.mxu0 0.0
  %728 = vmatpush1.msra.mxu0 0.0
  %729 = vmatprep.subr.mxu0 0.0
  %730 = vmatpush1.msra.mxu0 0.0
  %731 = vmatprep.subr.mxu0 0.0
  %732 = vmatpush1.msra.mxu0 0.0
  %733 = vmatprep.mubr.f32.mxu0 0.0
  %734 = vmatmul.mubr.f32.gmra.mrb[0].mxu0 %v255
  %v735 = vpop.f32.mrb[0].mxu0
  %v736 = vadd.f32 0.0, %v735
  %v737 = vpop.f32.mrb[0].mxu0
  %v738 = vadd.f32 0.0, %v737
  %739 = vdwg.mxu0
  %v740 = vadd.f32 %v665, %v667
  %741 = vadd.xlane.f32.xlu0 %v740
  %v742 = vpop.xlane.xlu0 %741
  %v743 = vmul.f32 %v742, 0.001953125
  %v744 = vadd.f32 %v736, %v738
  %745 = vadd.xlane.f32.xlu0 %v744
  %v746 = vpop.xlane.xlu0 %745
  %v747 = vmul.f32 %v746, 0.001953125
  %v748 = vmul.f32 %v743, %v743
  %v749 = vsub.f32 %v747, %v748
  %v750 = vadd.f32 %v749, 1e-05
  %v751 = vrsqrt.pop %v750
  %v752 = vmul.f32 %v439, %v751
  %v753 = vmul.f32 %v743, %v752
  %v754 = vsub.f32 %v441, %v753
  %756 = vset.pattern.permute.xlu0 0
  %757 = vperm.xlu0 %756, %v752
  %v758 = vpop.permute.xlu0 %757
  %v760 = vmul.f32 %v594, %v758
  %v761 = vmul.f32 %v595, %v758
  %763 = vset.pattern.permute.xlu0 0
  %764 = vperm.xlu0 %763, %v754
  %v765 = vpop.permute.xlu0 %764
  %v767 = vadd.f32 %v760, %v765
  %v768 = vadd.f32 %v761, %v765
  %769 = vst [vmem:[%s3] sm:$0xff] %v767
  %770 = vst [vmem:[%s3 + $0x8] sm:$0xff] %v768
  // Predicated region
  $region14: #{base_block_forward.1} parent=0 // pred_check
    _
  $region15: #{base_block_forward.1} parent=0 // pred_check_branch
    %772 = sbr.rel (0) target = $region17
  $region16: #{base_block_forward.1} parent=0 // pred_region
    _
  $region17: #{base_block_forward.1} parent=0 // pred_fallthru
    _
  // Predicated region
  $region18: #{base_block_forward.1} parent=0 // pred_check
    _
  $region19: #{base_block_forward.1} parent=0 // pred_check_branch
    %774 = sbr.rel (0) target = $region21
  $region20: #{base_block_forward.1} parent=0 // pred_region
    _
  $region21: #{base_block_forward.1} parent=0 // pred_fallthru
    _

</llo_original>
